<compile_context>
chip_gen: v6e
topology: v6e:2x2x1
jax: 0.10.0
libtpu: 0.0.40
codegen_flags: <defaults>
</compile_context>

<pallas_src>
import math
import functools

import jax
import jax.numpy as jnp
from jax.experimental import pallas as pl
from jax.experimental.pallas import tpu as pltpu

# Finite "minus infinity": avoids NaN (exp(-inf - -inf)) on fully-masked rows.
_NEG_LARGE = -1e30
_VMEM_LIMIT = 32 * 1024 * 1024


# ----------------------------------------------------------------------------
# Tile helpers
# ----------------------------------------------------------------------------
def _pick_q_tile(dim, pref=128):
    """Largest tile <= pref that divides `dim` and is a multiple of 8 (sublane)."""
    if dim <= pref:
        return dim
    t = (pref // 8) * 8
    while t >= 8:
        if dim % t == 0:
            return t
        t -= 8
    return dim


def _pick_kv_tile(dim, pref=512):
    """KV tile lands on the lane (last) dim of mask blocks -> multiple of 128 or full."""
    if dim <= pref:
        return dim
    t = (pref // 128) * 128
    while t >= 128:
        if dim % t == 0:
            return t
        t -= 128
    return dim


# ----------------------------------------------------------------------------
# Tiled linear projection kernel
# ----------------------------------------------------------------------------
def _linear_kernel(x_ref, w_ref, b_ref, o_ref, *, compute_dtype):
    x = x_ref[...].astype(compute_dtype)
    w = w_ref[...].astype(compute_dtype)
    y = jnp.dot(x, w, preferred_element_type=jnp.float32)
    o_ref[...] = (y + b_ref[...].astype(jnp.float32)).astype(o_ref.dtype)


def pallas_linear(x, w, b, *, compute_dtype=jnp.bfloat16, row_tile=512):
    """x: (N, in) @ w: (in, out) + b: (1, out) -> (N, out), row-tiled."""
    n, d_in = x.shape
    d_out = w.shape[1]
    tm = _pick_q_tile(n, row_tile)
    kernel = functools.partial(_linear_kernel, compute_dtype=compute_dtype)
    return pl.pallas_call(
        kernel,
        out_shape=jax.ShapeDtypeStruct((n, d_out), x.dtype),
        grid_spec=pltpu.PrefetchScalarGridSpec(
            num_scalar_prefetch=0,
            grid=(n // tm,),
            in_specs=[
                pl.BlockSpec((tm, d_in), lambda i: (i, 0)),
                pl.BlockSpec((d_in, d_out), lambda i: (0, 0)),  # weight stays resident
                pl.BlockSpec((1, d_out), lambda i: (0, 0)),
            ],
            out_specs=pl.BlockSpec((tm, d_out), lambda i: (i, 0)),
        ),
        compiler_params=pltpu.CompilerParams(
            dimension_semantics=("parallel",),
            vmem_limit_bytes=_VMEM_LIMIT,
        ),
    )(x, w, b)


# ----------------------------------------------------------------------------
# Attention kernels
# ----------------------------------------------------------------------------
def _attn_weights_kernel(*refs, scale, has_am, compute_dtype, neg):
    # Grid: (B, H, T_tiles).  Per step: one head, one q-tile, full S.
    if has_am:
        q_ref, k_ref, v_ref, kpm_ref, qpm_ref, am_ref, o_ref, w_ref = refs
    else:
        q_ref, k_ref, v_ref, kpm_ref, qpm_ref, o_ref, w_ref = refs
        am_ref = None

    # Fold the 1/sqrt(Dh) scale into the Q load (cheaper than scaling (tq,S)).
    q = (q_ref[...] * scale).astype(compute_dtype)   # (tq, Dh)
    k = k_ref[...].astype(compute_dtype)              # (S, Dh)
    v = v_ref[...].astype(compute_dtype)              # (S, Dh)

    # Q K^T without materializing k.T: contract last dims of both operands.
    s = jax.lax.dot_general(q, k, (((1,), (1,)), ((), ())),
                            preferred_element_type=jnp.float32)  # (tq, S)

    s = jnp.where(kpm_ref[...] != 0, neg, s)          # (1, S) key padding
    if am_ref is not None:
        s = jnp.where(am_ref[...] == 0, neg, s)       # (tq, S) attendable mask

    m = jnp.max(s, axis=-1, keepdims=True)            # (tq, 1)
    e = jnp.exp(s - m)
    l = jnp.sum(e, axis=-1, keepdims=True)
    w = e * pl.reciprocal(l, approx=True)

    # Zero rows that are either fully masked (would be NaN in the reference)
    # or belong to padded queries (matches masked_fill(weights, 0)).
    valid = jnp.logical_and(m > neg * 0.5, qpm_ref[...] == 0)   # (tq, 1)
    w = jnp.where(valid, w, 0.0)

    w_ref[...] = w.astype(w_ref.dtype)
    o_ref[...] = jax.lax.dot_general(
        w.astype(compute_dtype), v, (((1,), (0,)), ((), ())),
        preferred_element_type=jnp.float32).astype(o_ref.dtype)


def _attn_flash_kernel(*refs, scale, has_am, compute_dtype, neg):
    # Grid: (B, H, T_tiles, S_tiles).  Online softmax, no (T,S) weights output.
    if has_am:
        (q_ref, k_ref, v_ref, kpm_ref, qpm_ref, am_ref,
         o_ref, m_sc, l_sc, acc_sc) = refs
    else:
        (q_ref, k_ref, v_ref, kpm_ref, qpm_ref,
         o_ref, m_sc, l_sc, acc_sc) = refs
        am_ref = None

    s_idx = pl.program_id(3)

    @pl.when(s_idx == 0)
    def _():
        m_sc[...] = jnp.full_like(m_sc, neg)
        l_sc[...] = jnp.zeros_like(l_sc)
        acc_sc[...] = jnp.zeros_like(acc_sc)

    q = (q_ref[...] * scale).astype(compute_dtype)    # (tq, Dh)
    k = k_ref[...].astype(compute_dtype)              # (tk, Dh)
    v = v_ref[...].astype(compute_dtype)              # (tk, Dh)

    s = jax.lax.dot_general(q, k, (((1,), (1,)), ((), ())),
                            preferred_element_type=jnp.float32)  # (tq, tk)
    s = jnp.where(kpm_ref[...] != 0, neg, s)
    if am_ref is not None:
        s = jnp.where(am_ref[...] == 0, neg, s)

    m_prev = m_sc[...]
    m_new = jnp.maximum(m_prev, jnp.max(s, axis=-1, keepdims=True))
    alpha = jnp.exp(m_prev - m_new)
    p = jnp.exp(s - m_new)
    l_sc[...] = alpha * l_sc[...] + jnp.sum(p, axis=-1, keepdims=True)
    acc_sc[...] = alpha * acc_sc[...] + jax.lax.dot_general(
        p.astype(compute_dtype), v, (((1,), (0,)), ((), ())),
        preferred_element_type=jnp.float32)
    m_sc[...] = m_new

    @pl.when(s_idx == pl.num_programs(3) - 1)
    def _():
        valid = jnp.logical_and(m_sc[...] > neg * 0.5, qpm_ref[...] == 0)  # (tq,1)
        ctx = acc_sc[...] * pl.reciprocal(l_sc[...], approx=True)
        o_ref[...] = jnp.where(valid, ctx, 0.0).astype(o_ref.dtype)


def pallas_attention_core(q4, k4, v4, kpm, qpm, am, scale, *,
                          out_weights=True,
                          compute_dtype=jnp.bfloat16,
                          weights_dtype=jnp.float32,
                          q_tile=128, kv_tile=512):
    """q4/k4/v4: (B, H, L, Dh).  kpm: (B,1,S) int8, qpm: (B,T,1) int8,
    am: (B,T,S) int8 or None.  Masks are indexed per batch (shared across heads)."""
    B, H, T, Dh = q4.shape
    S = k4.shape[2]
    has_am = am is not None
    tq = _pick_q_tile(T, q_tile)
    n_tq = T // tq

    inputs = [q4, k4, v4, kpm, qpm] + ([am] if has_am else [])

    if out_weights:
        grid = (B, H, n_tq)
        in_specs = [
            pl.BlockSpec((None, None, tq, Dh), lambda b, h, t: (b, h, t, 0)),
            pl.BlockSpec((None, None, S, Dh), lambda b, h, t: (b, h, 0, 0)),
            pl.BlockSpec((None, None, S, Dh), lambda b, h, t: (b, h, 0, 0)),
            pl.BlockSpec((None, 1, S), lambda b, h, t: (b, 0, 0)),
            pl.BlockSpec((None, tq, 1), lambda b, h, t: (b, t, 0)),
        ]
        if has_am:
            in_specs.append(pl.BlockSpec((None, tq, S), lambda b, h, t: (b, t, 0)))
        out_specs = [
            pl.BlockSpec((None, None, tq, Dh), lambda b, h, t: (b, h, t, 0)),
            pl.BlockSpec((None, None, tq, S), lambda b, h, t: (b, h, t, 0)),
        ]
        out_shape = [
            jax.ShapeDtypeStruct((B, H, T, Dh), q4.dtype),
            jax.ShapeDtypeStruct((B, H, T, S), weights_dtype),
        ]
        kernel = functools.partial(_attn_weights_kernel, scale=scale, has_am=has_am,
                                   compute_dtype=compute_dtype, neg=_NEG_LARGE)
        ctx, w = pl.pallas_call(
            kernel,
            out_shape=out_shape,
            grid_spec=pltpu.PrefetchScalarGridSpec(
                num_scalar_prefetch=0, grid=grid,
                in_specs=in_specs, out_specs=out_specs),
            compiler_params=pltpu.CompilerParams(
                dimension_semantics=("parallel", "parallel", "parallel"),
                vmem_limit_bytes=_VMEM_LIMIT),
        )(*inputs)
        return ctx, w

    # out_weights == False: flash-style tiling over the KV axis.
    tk = _pick_kv_tile(S, kv_tile)
    n_tk = S // tk
    grid = (B, H, n_tq, n_tk)
    in_specs = [
        pl.BlockSpec((None, None, tq, Dh), lambda b, h, t, s: (b, h, t, 0)),
        pl.BlockSpec((None, None, tk, Dh), lambda b, h, t, s: (b, h, s, 0)),
        pl.BlockSpec((None, None, tk, Dh), lambda b, h, t, s: (b, h, s, 0)),
        pl.BlockSpec((None, 1, tk), lambda b, h, t, s: (b, 0, s)),
        pl.BlockSpec((None, tq, 1), lambda b, h, t, s: (b, t, 0)),
    ]
    if has_am:
        in_specs.append(pl.BlockSpec((None, tq, tk), lambda b, h, t, s: (b, t, s)))
    kernel = functools.partial(_attn_flash_kernel, scale=scale, has_am=has_am,
                               compute_dtype=compute_dtype, neg=_NEG_LARGE)
    ctx = pl.pallas_call(
        kernel,
        out_shape=jax.ShapeDtypeStruct((B, H, T, Dh), q4.dtype),
        grid_spec=pltpu.PrefetchScalarGridSpec(
            num_scalar_prefetch=0, grid=grid,
            in_specs=in_specs,
            out_specs=pl.BlockSpec((None, None, tq, Dh),
                                   lambda b, h, t, s: (b, h, t, 0)),
            scratch_shapes=[pltpu.VMEM((tq, 1), jnp.float32),
                            pltpu.VMEM((tq, 1), jnp.float32),
                            pltpu.VMEM((tq, Dh), jnp.float32)]),
        compiler_params=pltpu.CompilerParams(
            dimension_semantics=("parallel", "parallel", "parallel", "arbitrary"),
            vmem_limit_bytes=_VMEM_LIMIT),
    )(*inputs)
    return ctx, None


# ----------------------------------------------------------------------------
# Module wrapper (parameter setup / reshapes in plain JAX)
# ----------------------------------------------------------------------------
class PallasAttention:
    def __init__(self, embed_dim, num_heads=1, k_dim=None, v_dim=None,
                 bias_q=True, bias_k=True, bias_v=True, key=None,
                 compute_dtype=jnp.bfloat16):
        assert embed_dim % num_heads == 0
        self.embed_dim = embed_dim
        self.num_heads = num_heads
        self.head_dim = embed_dim // num_heads
        self.k_dim = embed_dim if k_dim is None else k_dim
        self.v_dim = embed_dim if v_dim is None else v_dim
        self.compute_dtype = compute_dtype

        if key is None:
            key = jax.random.PRNGKey(42)
        ks = jax.random.split(key, 8)

        def init_linear(kw, kb, in_dim, out_dim, use_bias):
            bound = 1.0 / math.sqrt(in_dim)
            w = jax.random.uniform(kw, (in_dim, out_dim), jnp.float32,
                                   minval=-bound, maxval=bound)
            if use_bias:
                b = jax.random.uniform(kb, (1, out_dim), jnp.float32,
                                       minval=-bound, maxval=bound)
            else:
                b = jnp.zeros((1, out_dim), jnp.float32)
            return w, b

        self.wq, self.bq = init_linear(ks[0], ks[1], embed_dim, embed_dim, bias_q)
        self.wk, self.bk = init_linear(ks[2], ks[3], self.k_dim, embed_dim, bias_k)
        self.wv, self.bv = init_linear(ks[4], ks[5], self.v_dim, embed_dim, bias_v)
        self.wo, self.bo = init_linear(ks[6], ks[7], embed_dim, embed_dim, bias_q)

    def _linear(self, x, w, b):
        B, L, _ = x.shape
        y = pallas_linear(x.reshape(B * L, -1), w, b, compute_dtype=self.compute_dtype)
        return y.reshape(B, L, -1)

    def _split_heads(self, x):
        # (B, L, E) -> (B, H, L, Dh)
        # TODO(synk): head split/merge still uses an XLA transpose; it could be
        # folded into BlockSpec index_maps when head_dim is a multiple of 128.
        B, L, _ = x.shape
        x = x.reshape(B, L, self.num_heads, self.head_dim)
        return jnp.transpose(x, (0, 2, 1, 3))

    def __call__(self, queries, keys, values,
                 q_padding_mask=None, key_padding_mask=None, attn_mask=None,
                 out_weights=True):
        B, T, _ = queries.shape
        S = keys.shape[1]
        H, Dh, E = self.num_heads, self.head_dim, self.embed_dim

        q = self._linear(queries, self.wq, self.bq)   # (B, T, E)
        k = self._linear(keys, self.wk, self.bk)      # (B, S, E)
        v = self._linear(values, self.wv, self.bv)    # (B, S, E)

        q4 = self._split_heads(q)                      # (B, H, T, Dh)
        k4 = self._split_heads(k)                      # (B, H, S, Dh)
        v4 = self._split_heads(v)                      # (B, H, S, Dh)

        # int8 masks in their un-broadcast per-batch shapes (shared across heads
        # through the BlockSpec index_maps — the broadcast never touches HBM).
        if key_padding_mask is None:
            kpm = jnp.zeros((B, 1, S), jnp.int8)
        else:
            kpm = key_padding_mask.astype(jnp.int8).reshape(B, 1, S)
        if q_padding_mask is None:
            qpm = jnp.zeros((B, T, 1), jnp.int8)
        else:
            qpm = q_padding_mask.astype(jnp.int8).reshape(B, T, 1)
        am = None
        if attn_mask is not None:
            am = jnp.broadcast_to(attn_mask.astype(jnp.int8), (B, T, S))

        # TODO(synk): `compute_scores` is abstract in the PyTorch base class;
        # scaled dot-product is used here as the canonical concrete implementation.
        scale = 1.0 / math.sqrt(Dh)
        context4, weights4 = pallas_attention_core(
            q4, k4, v4, kpm, qpm, am, scale,
            out_weights=out_weights, compute_dtype=self.compute_dtype)

        context = jnp.transpose(context4, (0, 2, 1, 3)).reshape(B, T, E)
        context = self._linear(context, self.wo, self.bo)

        weights = None
        if out_weights:
            weights = weights4.reshape(B * H, T, S)
        return context, weights


# ----------------------------------------------------------------------------
# Demo
# ----------------------------------------------------------------------------
if __name__ == "__main__":
    B, T, S, E, H = 2, 8, 8, 32, 4

    key = jax.random.PRNGKey(0)
    kq, kk, kv = jax.random.split(key, 3)
    queries = jax.random.normal(kq, (B, T, E), jnp.float32)
    keys = jax.random.normal(kk, (B, S, E), jnp.float32)
    values = jax.random.normal(kv, (B, S, E), jnp.float32)

    # padding masks: True = padding
    key_padding_mask = jnp.zeros((B, S), bool).at[0, 6:].set(True)
    q_padding_mask = jnp.zeros((B, T), bool).at[1, 7:].set(True)

    attn = PallasAttention(embed_dim=E, num_heads=H, key=jax.random.PRNGKey(7))

    # Path 1: weights materialized (matches PyTorch default out_weights=True).
    context, weights = attn(queries, keys, values,
                            q_padding_mask=q_padding_mask,
                            key_padding_mask=key_padding_mask,
                            attn_mask=None, out_weights=True)
    # Path 2: flash-style online softmax, no weights output.
    context2, weights2 = attn(queries, keys, values,
                              q_padding_mask=q_padding_mask,
                              key_padding_mask=key_padding_mask,
                              attn_mask=None, out_weights=False)
    # Path 3: with an explicit (causal) attendable mask.
    causal = jnp.tril(jnp.ones((T, S), bool))
    context3, weights3 = attn(queries, keys, values,
                              q_padding_mask=q_padding_mask,
                              key_padding_mask=key_padding_mask,
                              attn_mask=causal, out_weights=True)

    jax.block_until_ready(context)
    jax.block_until_ready(context2)
    jax.block_until_ready(context3)

    assert context.shape == (B, T, E)
    assert weights.shape == (B * H, T, S)
    assert weights2 is None
    assert bool(jnp.all(jnp.isfinite(context)))
    assert bool(jnp.all(jnp.isfinite(weights)))
    assert bool(jnp.all(jnp.isfinite(context3)))
    # Key padding (batch 0, keys 6:) and query padding (batch 1, query 7) zero weights.
    assert bool(jnp.all(weights[:H, :, 6:] == 0.0))
    assert bool(jnp.all(weights[H:, 7, :] == 0.0))
    # Causal mask: query 0 attends only to key 0.
    assert bool(jnp.all(weights3[:, 0, 1:] == 0.0))
    # Both attention paths agree.
    assert bool(jnp.allclose(context, context2, atol=5e-2, rtol=5e-2))
    print("KERNEL_OK")
</pallas_src>

<mosaic_0001>
module attributes {stable_mosaic.version = 11 : i64} {
  func.func @_linear_kernel(%arg0: i32, %arg1: memref<16x32xf32, #tpu.memory_space<vmem>>, %arg2: memref<32x32xf32, #tpu.memory_space<vmem>>, %arg3: memref<1x32xf32, #tpu.memory_space<vmem>>, %arg4: memref<16x32xf32, #tpu.memory_space<vmem>>) attributes {dimension_semantics = [#tpu.dimension_semantics<parallel>], iteration_bounds = array<i64: 1>, scalar_prefetch = 0 : i64, scratch_operands = 0 : i64, tpu.core_type = #tpu.core_type<tc>, window_params = [{transform_indices = @transform_0, window_bounds = array<i64: 16, 32>}, {pipeline_mode = #tpu.pipeline_mode<synchronous>, transform_indices = @transform_1, window_bounds = array<i64: 32, 32>}, {pipeline_mode = #tpu.pipeline_mode<synchronous>, transform_indices = @transform_2, window_bounds = array<i64: 1, 32>}, {transform_indices = @transform_3, window_bounds = array<i64: 16, 32>}]} {
    %c0 = arith.constant 0 : index
    %c0_0 = arith.constant 0 : index
    %0 = vector.load %arg1[%c0, %c0_0] : memref<16x32xf32, #tpu.memory_space<vmem>>, vector<16x32xf32>
    %1 = arith.truncf %0 : vector<16x32xf32> to vector<16x32xbf16>
    %c0_1 = arith.constant 0 : index
    %c0_2 = arith.constant 0 : index
    %2 = vector.load %arg2[%c0_1, %c0_2] : memref<32x32xf32, #tpu.memory_space<vmem>>, vector<32x32xf32>
    %3 = arith.truncf %2 : vector<32x32xf32> to vector<32x32xbf16>
    %cst = arith.constant dense<0.000000e+00> : vector<16x32xf32>
    %4 = tpu.matmul %1, %3, %cst {dimension_numbers = #tpu.dot_dimension_numbers<[1], [0], [0], [1], [0, 0, 1, 1], [], []>} : vector<16x32xbf16>, vector<32x32xbf16>, vector<16x32xf32> -> vector<16x32xf32>
    %c0_3 = arith.constant 0 : index
    %c0_4 = arith.constant 0 : index
    %5 = vector.load %arg3[%c0_3, %c0_4] : memref<1x32xf32, #tpu.memory_space<vmem>>, vector<1x32xf32>
    %6 = vector.broadcast %5 : vector<1x32xf32> to vector<16x32xf32>
    %7 = arith.addf %4, %6 : vector<16x32xf32>
    %c0_5 = arith.constant 0 : index
    %c0_6 = arith.constant 0 : index
    %8 = vector.load %arg4[%c0_5, %c0_6] : memref<16x32xf32, #tpu.memory_space<vmem>>, vector<16x32xf32>
    tpu.vector_store %arg4[%c0_5, %c0_6], %7 {strides = array<i32>} : memref<16x32xf32, #tpu.memory_space<vmem>>, vector<16x32xf32>,
    return
  }
  func.func @transform_0(%arg0: i32) -> (i32, i32) {
    %c0_i32 = arith.constant 0 : i32
    %c0_i32_0 = arith.constant 0 : i32
    return %arg0, %c0_i32 : i32, i32
  }
  func.func @transform_1(%arg0: i32) -> (i32, i32) {
    %c0_i32 = arith.constant 0 : i32
    %c0_i32_0 = arith.constant 0 : i32
    %c0_i32_1 = arith.constant 0 : i32
    return %c0_i32, %c0_i32_0 : i32, i32
  }
  func.func @transform_2(%arg0: i32) -> (i32, i32) {
    %c0_i32 = arith.constant 0 : i32
    %c0_i32_0 = arith.constant 0 : i32
    %c0_i32_1 = arith.constant 0 : i32
    return %c0_i32, %c0_i32_0 : i32, i32
  }
  func.func @transform_3(%arg0: i32) -> (i32, i32) {
    %c0_i32 = arith.constant 0 : i32
    %c0_i32_0 = arith.constant 0 : i32
    return %arg0, %c0_i32 : i32, i32
  }
}

</mosaic_0001>

<llo_original>
// kernel: tpu_custom_call.1
$region0: #{tpu_custom_call.1}
  #allocation0 [shape = 'u32[]', space=smem, size = 0x4, offset = 0x4, fixed_abs, tag = 'smem constant byte address 0x4 - core index']
  #allocation1 [shape = 'u32[144,128]{1,0:T(1,128)}', space=vmem, size = 0x12000, scoped, tag = 'internal scratch']
  %s0 = inlined_call_operand.hbm [shape: f32[16,32], index: 0, kind: input, shape index: {}]
  %s1 = inlined_call_operand.hbm [shape: f32[32,32], index: 1, kind: input, shape index: {}]
  %s2 = inlined_call_operand.vmem [shape: f32[1,32], index: 2, kind: input, shape index: {}]
  %s3 = inlined_call_operand.hbm [shape: f32[16,32], index: 3, kind: output, shape index: {}]
  %s4 = sld [smem:[#allocation0]]
  $region30: #{tpu_custom_call.1} parent=0
    _
  %s6 = ssub.s32 1, %s4
  %s7 = scalar_select 0, %s6, %s4
  $region1: #{tpu_custom_call.1} parent=0
    #allocation2 [shape = 'u8[8192]{0}', space=vmem, size = 0x2000, scoped, tag = 'input window, operand 0, single buffered']
    #allocation3 [shape = 's32[1]{0}', space=sflag, size = 0x4, scoped, tag = 'scoped memory for tpu_custom_call.1']
    #allocation4 [shape = 's32[1]{0}', space=sflag, size = 0x4, scoped, tag = 'scoped memory for tpu_custom_call.1']
    #allocation5 [shape = 'u8[16384]{0}', space=vmem, size = 0x4000, scoped, tag = 'input window, operand 1, single buffered']
    #allocation6 [shape = 's32[1]{0}', space=sflag, size = 0x4, scoped, tag = 'scoped memory for tpu_custom_call.1']
    #allocation7 [shape = 'u8[8192]{0}', space=vmem, size = 0x2000, scoped, tag = 'output window, operand 0, single buffered']
    %8 = vsyncpa [#allocation3], 0
    %9 = vsyncpa [#allocation6], 0
    %10 = vsyncpa [#allocation4], 0
    // Predicated region
    $region2: #{tpu_custom_call.1} parent=1 // pred_check
      _
    $region3: #{tpu_custom_call.1} parent=1 // pred_check_branch
      %12 = sbr.rel (0) target = $region5
    $region4: #{tpu_custom_call.1} parent=1 // pred_region
      %s14 = ssub.s32 256, 256
      %15 = vsyncadd [#allocation3], %s14
      %s16 = sshll.u32 [#allocation2], 4
      %s17 = int_to_ptr.vmem [resolvable:$true] %s16
      %22 = dma.hbm_to_vmem [thread:$0]  %s0, 256, %s17, [#allocation3], 128, 128, 8
    $region5: #{tpu_custom_call.1} parent=1 // pred_fallthru
      _
    // Predicated region
    $region6: #{tpu_custom_call.1} parent=1 // pred_check
      _
    $region7: #{tpu_custom_call.1} parent=1 // pred_check_branch
      %24 = sbr.rel (0) target = $region9
    $region8: #{tpu_custom_call.1} parent=1 // pred_region
      %s26 = ssub.s32 512, 512
      %27 = vsyncadd [#allocation6], %s26
      %s28 = sshll.u32 [#allocation5], 4
      %s29 = int_to_ptr.vmem [resolvable:$true] %s28
      %34 = dma.hbm_to_vmem [thread:$0]  %s1, 512, %s29, [#allocation6], 128, 128, 8
    $region9: #{tpu_custom_call.1} parent=1 // pred_fallthru
      _
    // Predicated region
    $region10: #{tpu_custom_call.1} parent=1 // pred_check
      _
    $region11: #{tpu_custom_call.1} parent=1 // pred_check_branch
      %36 = sbr.rel (0) target = $region13
    $region12: #{tpu_custom_call.1} parent=1 // pred_region
      _
    $region13: #{tpu_custom_call.1} parent=1 // pred_fallthru
      _
    // Predicated region
    $region14: #{tpu_custom_call.1} parent=1 // pred_check
      _
    $region15: #{tpu_custom_call.1} parent=1 // pred_check_branch
      %38 = sbr.rel (0) target = $region17
    $region16: #{tpu_custom_call.1} parent=1 // pred_region
      %39 = dma.done [#allocation3], 256
    $region17: #{tpu_custom_call.1} parent=1 // pred_fallthru
      _
    // Predicated region
    $region18: #{tpu_custom_call.1} parent=1 // pred_check
      _
    $region19: #{tpu_custom_call.1} parent=1 // pred_check_branch
      %41 = sbr.rel (0) target = $region21
    $region20: #{tpu_custom_call.1} parent=1 // pred_region
      %42 = dma.done [#allocation6], 512
    $region21: #{tpu_custom_call.1} parent=1 // pred_fallthru
      _
    %v44 = vld [vmem:[#allocation2] sm:$0xff]
    %v45 = vld [vmem:[#allocation2 + $0x8] sm:$0xff]
    %v46 = vpack.c.bf16 %v45, %v44
    %v47 = vld [vmem:[#allocation5] sm:$0xff]
    %v48 = vld [vmem:[#allocation5 + $0x8] sm:$0xff]
    %v49 = vld [vmem:[#allocation5 + $0x10] sm:$0xff]
    %v50 = vld [vmem:[#allocation5 + $0x18] sm:$0xff]
    %v51 = vpack.c.bf16 %v48, %v47
    %v52 = vpack.c.bf16 %v50, %v49
    %v53 = vld [vmem:[%s2] sm:$0x1]
    %v55 = vlaneseq
    %v56 = vshrl.u32 %v55, 7
    %v57 = vsub.s32 0, %v56
    %v58 = vrot.slane %v53, %v57
    %vm60 = vcmask 261120
    %v62 = vsel %vm60, %v46, 0
    %64 = vmatprep.subr.bf16.mxu0 0
    %65 = vmatpush1.bf16.msra.mxu0 0
    %66 = vmatprep.subr.bf16.mxu0 0
    %67 = vmatpush1.bf16.msra.mxu0 0
    %68 = vmatprep.subr.bf16.mxu0 0
    %69 = vmatpush1.bf16.msra.mxu0 0
    %70 = vmatprep.subr.bf16.mxu0 0
    %71 = vmatpush1.bf16.msra.mxu0 0
    %72 = vmatprep.subr.bf16.mxu0 0
    %73 = vmatpush1.bf16.msra.mxu0 0
    %74 = vmatprep.subr.bf16.mxu0 0
    %75 = vmatpush1.bf16.msra.mxu0 0
    %76 = vmatprep.subr.bf16.mxu0 0
    %77 = vmatpush1.bf16.msra.mxu0 %v52
    %78 = vmatprep.subr.bf16.mxu0 0
    %79 = vmatpush1.bf16.msra.mxu0 %v51
    %80 = vmatprep.subr.bf16.mxu0 0
    %81 = vmatpush2.bf16.msra.mxu0 0
    %82 = vmatprep.subr.bf16.mxu0 0
    %83 = vmatpush2.bf16.msra.mxu0 0
    %84 = vmatprep.subr.bf16.mxu0 0
    %85 = vmatpush2.bf16.msra.mxu0 0
    %86 = vmatprep.subr.bf16.mxu0 0
    %87 = vmatpush2.bf16.msra.mxu0 0
    %88 = vmatprep.subr.bf16.mxu0 0
    %89 = vmatpush2.bf16.msra.mxu0 0
    %90 = vmatprep.subr.bf16.mxu0 0
    %91 = vmatpush2.bf16.msra.mxu0 0
    %92 = vmatprep.subr.bf16.mxu0 0
    %93 = vmatpush2.bf16.msra.mxu0 0
    %94 = vmatprep.subr.bf16.mxu0 0
    %95 = vmatpush2.bf16.msra.mxu0 0
    %96 = vmatprep.mubr.bf16.mxu0 0
    %97 = vmatmul.mubr.bf16.gmra.mxu0 %v62
    %v98 = vpop.f32.mrf.mxu0
    %v99 = vadd.f32 %v58, %v98
    %v100 = vpop.f32.mrf.mxu0
    %v101 = vpop.f32.mrf.mxu0
    %v102 = vadd.f32 %v58, %v101
    %v103 = vpop.f32.mrf.mxu0
    %104 = vdwg.mxu0
    %105 = vst.msk [vmem:[#allocation7] sm:$0xff] %vm60, %v99
    %106 = vst.msk [vmem:[#allocation7 + $0x8] sm:$0xff] %vm60, %v102
    // Predicated region
    $region22: #{tpu_custom_call.1} parent=1 // pred_check
      _
    $region23: #{tpu_custom_call.1} parent=1 // pred_check_branch
      %108 = sbr.rel (0) target = $region25
    $region24: #{tpu_custom_call.1} parent=1 // pred_region
      %s110 = ssub.s32 256, 256
      %111 = vsyncadd [#allocation4], %s110
      %s112 = sshll.u32 [#allocation7], 4
      %s113 = int_to_ptr.vmem [resolvable:$true] %s112
      %118 = dma.vmem_to_hbm [thread:$0]  %s113, 256, %s3, [#allocation4], 128, 128, 8
    $region25: #{tpu_custom_call.1} parent=1 // pred_fallthru
      _
    // Predicated region
    $region26: #{tpu_custom_call.1} parent=1 // pred_check
      _
    $region27: #{tpu_custom_call.1} parent=1 // pred_check_branch
      %120 = sbr.rel (0) target = $region29
    $region28: #{tpu_custom_call.1} parent=1 // pred_region
      %121 = dma.done [#allocation4], 256
    $region29: #{tpu_custom_call.1} parent=1 // pred_fallthru
      _
    %122 = vsyncpa [#allocation3], 1
    %123 = vsyncpa [#allocation6], 1
    %124 = vsyncpa [#allocation4], 1

</llo_original>
